<compile_context>
chip_gen: v5e
topology: v5e:2x2
jax: 0.10.0
libtpu: 0.0.40
codegen_flags: <defaults>
</compile_context>

<pallas_src>
import functools

import jax
import jax.numpy as jnp
import numpy as np
from jax import lax
from jax.experimental import pallas as pl
from jax.experimental.pallas import tpu as pltpu


def _round_up(x, m):
    return ((x + m - 1) // m) * m


def _focal_loss_kernel(pred_ref, target_ref, out_ref, acc_ref,
                       *, alpha, gamma, n, steps_per_core):
    c = pl.program_id(0)          # parallel axis (TensorCore split on v7x)
    i = pl.program_id(1)          # reduction axis (arbitrary)
    tr = pred_ref.shape[0]
    lane = pred_ref.shape[1]
    chunk = tr * lane

    @pl.when(i == 0)
    def _():
        acc_ref[...] = jnp.zeros_like(acc_ref)

    logits = pred_ref[...].astype(jnp.float32)
    t = target_ref[...].astype(jnp.float32)
    is_pos = t == 1.0

    # sigmoid -> probability of the class selected by target (0 or 1)
    p = jax.nn.sigmoid(logits)
    probs = jnp.where(is_pos, p, 1.0 - p)
    probs = jnp.clip(probs, 0.0001, 1.0)
    log_p = jnp.log(probs)

    alpha_t = jnp.where(is_pos, jnp.float32(alpha), jnp.float32(1.0 - alpha))
    one_minus_p = 1.0 - probs
    if float(gamma) == int(gamma):
        focal = lax.integer_pow(one_minus_p, int(gamma))   # plain VPU square
    else:
        focal = one_minus_p ** gamma                        # falls back to pow
    per_elem = -alpha_t * focal * log_p

    # Global element offset of this tile; only tiles that overlap the ragged
    # tail (or are pure padding) pay for the iota mask.
    tile_start = (c * steps_per_core + i) * chunk
    is_full = tile_start + chunk <= n

    @pl.when(is_full)
    def _():
        acc_ref[...] += per_elem.reshape(tr // 8, 8, lane).sum(axis=0)

    @pl.when(jnp.logical_not(is_full))
    def _():
        row = lax.broadcasted_iota(jnp.int32, (tr, lane), 0)
        col = lax.broadcasted_iota(jnp.int32, (tr, lane), 1)
        idx = tile_start + row * lane + col
        masked = jnp.where(idx < n, per_elem, 0.0)
        acc_ref[...] += masked.reshape(tr // 8, 8, lane).sum(axis=0)

    @pl.when(i == pl.num_programs(1) - 1)
    def _():
        out_ref[0] = acc_ref[...]


def focal_loss(pred, target, *, alpha=0.25, gamma=2, size_average=True,
               tile_rows=1024):
    """Pallas TPU focal loss. pred: logits (any shape), target: {0,1} same size."""
    lane = 128
    ncores = 2  # leading parallel axis: both TCs on v7x, harmless on v5e/v6e

    pred_flat = jnp.reshape(pred, (-1,)).astype(jnp.float32)
    # targets are {0,1}: ship them as int8 -> 5 B/elem of HBM traffic total
    target_flat = jnp.reshape(target, (-1,)).astype(jnp.int8)
    n = pred_flat.shape[0]

    rows_needed = -(-n // lane)
    # tile rows: multiple of 32 (int8 native tiling), clamped for tiny inputs
    tr = max(32, min(_round_up(int(tile_rows), 32), _round_up(rows_needed, 32)))
    tiles = max(ncores, _round_up(-(-rows_needed // tr), ncores))
    steps_per_core = tiles // ncores
    total_rows = tiles * tr

    pad = total_rows * lane - n
    if pad:  # skip the pad copy entirely when already aligned
        pred_flat = jnp.pad(pred_flat, (0, pad))
        target_flat = jnp.pad(target_flat, (0, pad))

    pred2d = pred_flat.reshape(total_rows, lane)
    target2d = target_flat.reshape(total_rows, lane)

    kernel = functools.partial(
        _focal_loss_kernel, alpha=float(alpha), gamma=gamma, n=n,
        steps_per_core=steps_per_core)

    in_map = lambda c, i: (c * steps_per_core + i, 0)

    partials = pl.pallas_call(
        kernel,
        out_shape=jax.ShapeDtypeStruct((ncores, 8, lane), jnp.float32),
        grid_spec=pltpu.PrefetchScalarGridSpec(
            num_scalar_prefetch=0,
            grid=(ncores, steps_per_core),
            in_specs=[
                pl.BlockSpec((tr, lane), in_map),
                pl.BlockSpec((tr, lane), in_map),
            ],
            out_specs=pl.BlockSpec((1, 8, lane), lambda c, i: (c, 0, 0)),
            scratch_shapes=[pltpu.VMEM((8, lane), jnp.float32)],
        ),
        compiler_params=pltpu.CompilerParams(
            dimension_semantics=("parallel", "arbitrary")),
    )(pred2d, target2d)

    total = jnp.sum(partials)   # final cross-lane/core reduce in XLA (tiny)
    if size_average:
        return total / jnp.float32(n)
    return total


def _focal_loss_ref(pred, target, *, alpha=0.25, gamma=2, size_average=True):
    """Pure-JAX reference mirroring the PyTorch module."""
    p = jax.nn.sigmoid(jnp.reshape(pred, (-1,)).astype(jnp.float32))
    t = jnp.reshape(target, (-1,)).astype(jnp.float32)
    probs = jnp.where(t == 1.0, p, 1.0 - p)
    probs = jnp.clip(probs, 0.0001, 1.0)
    log_p = jnp.log(probs)
    alpha_t = jnp.where(t == 1.0, alpha, 1.0 - alpha)
    batch_loss = -alpha_t * (1.0 - probs) ** gamma * log_p
    return jnp.mean(batch_loss) if size_average else jnp.sum(batch_loss)


if __name__ == "__main__":
    key = jax.random.PRNGKey(0)
    k1, k2 = jax.random.split(key)

    # small shapes consistent with a dense prediction map (NCHW-ish logits)
    pred = jax.random.normal(k1, (2, 4, 16, 16), dtype=jnp.float32)
    target = jax.random.bernoulli(k2, p=0.3, shape=(2, 4, 16, 16)).astype(
        jnp.float32)

    loss = focal_loss(pred, target, alpha=0.25, gamma=2, size_average=True)
    loss = jax.block_until_ready(loss)

    ref = _focal_loss_ref(pred, target, alpha=0.25, gamma=2, size_average=True)
    np.testing.assert_allclose(np.asarray(loss), np.asarray(ref),
                               rtol=1e-5, atol=1e-6)
    print("KERNEL_OK")
</pallas_src>

<mosaic_0001>
module attributes {stable_mosaic.version = 11 : i64} {
  func.func @_focal_loss_kernel(%arg0: i32, %arg1: i32, %arg2: memref<32x128xf32, #tpu.memory_space<vmem>>, %arg3: memref<32x128xi8, #tpu.memory_space<vmem>>, %arg4: memref<1x8x128xf32, #tpu.memory_space<vmem>>, %arg5: memref<8x128xf32, #tpu.memory_space<vmem>>) attributes {dimension_semantics = [#tpu.dimension_semantics<parallel>, #tpu.dimension_semantics<arbitrary>], iteration_bounds = array<i64: 2, 1>, scalar_prefetch = 0 : i64, scratch_operands = 1 : i64, tpu.core_type = #tpu.core_type<tc>, window_params = [{transform_indices = @transform_0, window_bounds = array<i64: 32, 128>}, {transform_indices = @transform_1, window_bounds = array<i64: 32, 128>}, {transform_indices = @transform_2, window_bounds = array<i64: 1, 8, 128>}]} {
    %c0_i32 = arith.constant 0 : i32
    %0 = arith.cmpi eq, %arg1, %c0_i32 : i32
    %1 = arith.extui %0 : i1 to i32
    %c0_i32_0 = arith.constant 0 : i32
    %2 = arith.cmpi ne, %1, %c0_i32_0 : i32
    scf.if %2 {
      %cst_17 = arith.constant 0.000000e+00 : f32
      %44 = vector.broadcast %cst_17 : f32 to vector<8x128xf32>
      %c0_18 = arith.constant 0 : index
      %c0_19 = arith.constant 0 : index
      %45 = vector.load %arg5[%c0_18, %c0_19] : memref<8x128xf32, #tpu.memory_space<vmem>>, vector<8x128xf32>
      tpu.vector_store %arg5[%c0_18, %c0_19], %44 {strides = array<i32>} : memref<8x128xf32, #tpu.memory_space<vmem>>, vector<8x128xf32>,
    } else {
    }
    %c0 = arith.constant 0 : index
    %c0_1 = arith.constant 0 : index
    %3 = vector.load %arg2[%c0, %c0_1] : memref<32x128xf32, #tpu.memory_space<vmem>>, vector<32x128xf32>
    %c0_2 = arith.constant 0 : index
    %c0_3 = arith.constant 0 : index
    %4 = vector.load %arg3[%c0_2, %c0_3] : memref<32x128xi8, #tpu.memory_space<vmem>>, vector<32x128xi8>
    %5 = arith.sitofp %4 : vector<32x128xi8> to vector<32x128xf32>
    %cst = arith.constant 1.000000e+00 : f32
    %6 = vector.broadcast %cst : f32 to vector<32x128xf32>
    %7 = arith.cmpf oeq, %5, %6 : vector<32x128xf32>
    %8 = arith.negf %3 : vector<32x128xf32>
    %9 = math.exp %8 : vector<32x128xf32>
    %cst_4 = arith.constant 1.000000e+00 : f32
    %10 = vector.broadcast %cst_4 : f32 to vector<32x128xf32>
    %11 = arith.addf %10, %9 : vector<32x128xf32>
    %12 = arith.divf %10, %11 : vector<32x128xf32>
    %cst_5 = arith.constant 1.000000e+00 : f32
    %13 = vector.broadcast %cst_5 : f32 to vector<32x128xf32>
    %14 = arith.subf %13, %12 : vector<32x128xf32>
    %15 = arith.select %7, %12, %14 : vector<32x128xi1>, vector<32x128xf32>
    %cst_6 = arith.constant 9.99999974E-5 : f32
    %cst_7 = arith.constant 1.000000e+00 : f32
    %16 = vector.broadcast %cst_6 : f32 to vector<32x128xf32>
    %17 = arith.maximumf %16, %15 : vector<32x128xf32>
    %18 = vector.broadcast %cst_7 : f32 to vector<32x128xf32>
    %19 = arith.minimumf %18, %17 : vector<32x128xf32>
    %20 = math.log %19 : vector<32x128xf32>
    %cst_8 = arith.constant 2.500000e-01 : f32
    %cst_9 = arith.constant 7.500000e-01 : f32
    %21 = vector.broadcast %cst_8 : f32 to vector<32x128xf32>
    %22 = vector.broadcast %cst_9 : f32 to vector<32x128xf32>
    %23 = arith.select %7, %21, %22 : vector<32x128xi1>, vector<32x128xf32>
    %cst_10 = arith.constant 1.000000e+00 : f32
    %24 = vector.broadcast %cst_10 : f32 to vector<32x128xf32>
    %25 = arith.subf %24, %19 : vector<32x128xf32>
    %26 = arith.mulf %25, %25 : vector<32x128xf32>
    %cst_11 = arith.constant 0.000000e+00 : f32
    %27 = vector.broadcast %cst_11 : f32 to vector<32x128xf32>
    %28 = arith.subf %27, %23 : vector<32x128xf32>
    %29 = arith.mulf %28, %26 : vector<32x128xf32>
    %30 = arith.mulf %29, %20 : vector<32x128xf32>
    %c1_i32 = arith.constant 1 : i32
    %31 = arith.muli %arg0, %c1_i32 : i32
    %32 = arith.addi %31, %arg1 : i32
    %c4096_i32 = arith.constant 4096 : i32
    %33 = arith.muli %32, %c4096_i32 : i32
    %c4096_i32_12 = arith.constant 4096 : i32
    %34 = arith.addi %33, %c4096_i32_12 : i32
    %c2048_i32 = arith.constant 2048 : i32
    %35 = arith.cmpi sle, %34, %c2048_i32 : i32
    %36 = arith.extui %35 : i1 to i32
    %c0_i32_13 = arith.constant 0 : i32
    %37 = arith.cmpi ne, %36, %c0_i32_13 : i32
    scf.if %37 {
      %c0_17 = arith.constant 0 : index
      %c0_18 = arith.constant 0 : index
      %44 = vector.load %arg5[%c0_17, %c0_18] : memref<8x128xf32, #tpu.memory_space<vmem>>, vector<8x128xf32>
      %45 = vector.shape_cast %30 : vector<32x128xf32> to vector<4x8x128xf32>
      %cst_19 = arith.constant dense<0.000000e+00> : vector<8x128xf32>
      %46 = vector.multi_reduction <add>, %45, %cst_19 [0] : vector<4x8x128xf32> to vector<8x128xf32>
      %47 = arith.addf %44, %46 : vector<8x128xf32>
      %c0_20 = arith.constant 0 : index
      %c0_21 = arith.constant 0 : index
      %48 = vector.load %arg5[%c0_20, %c0_21] : memref<8x128xf32, #tpu.memory_space<vmem>>, vector<8x128xf32>
      tpu.vector_store %arg5[%c0_20, %c0_21], %47 {strides = array<i32>} : memref<8x128xf32, #tpu.memory_space<vmem>>, vector<8x128xf32>,
    } else {
    }
    %true = arith.constant true
    %38 = arith.xori %35, %true : i1
    %39 = arith.extui %38 : i1 to i32
    %c0_i32_14 = arith.constant 0 : i32
    %40 = arith.cmpi ne, %39, %c0_i32_14 : i32
    scf.if %40 {
      %44 = tpu.iota {dimensions = array<i32: 0>} : vector<32x128xi32>
      %45 = tpu.iota {dimensions = array<i32: 1>} : vector<32x128xi32>
      %c128_i32 = arith.constant 128 : i32
      %46 = vector.broadcast %c128_i32 : i32 to vector<32x128xi32>
      %47 = arith.muli %44, %46 : vector<32x128xi32>
      %48 = vector.broadcast %33 : i32 to vector<32x128xi32>
      %49 = arith.addi %48, %47 : vector<32x128xi32>
      %50 = arith.addi %49, %45 : vector<32x128xi32>
      %c2048_i32_17 = arith.constant 2048 : i32
      %51 = vector.broadcast %c2048_i32_17 : i32 to vector<32x128xi32>
      %52 = arith.cmpi slt, %50, %51 : vector<32x128xi32>
      %cst_18 = arith.constant 0.000000e+00 : f32
      %53 = vector.broadcast %cst_18 : f32 to vector<32x128xf32>
      %54 = arith.select %52, %30, %53 : vector<32x128xi1>, vector<32x128xf32>
      %c0_19 = arith.constant 0 : index
      %c0_20 = arith.constant 0 : index
      %55 = vector.load %arg5[%c0_19, %c0_20] : memref<8x128xf32, #tpu.memory_space<vmem>>, vector<8x128xf32>
      %56 = vector.shape_cast %54 : vector<32x128xf32> to vector<4x8x128xf32>
      %cst_21 = arith.constant dense<0.000000e+00> : vector<8x128xf32>
      %57 = vector.multi_reduction <add>, %56, %cst_21 [0] : vector<4x8x128xf32> to vector<8x128xf32>
      %58 = arith.addf %55, %57 : vector<8x128xf32>
      %c0_22 = arith.constant 0 : index
      %c0_23 = arith.constant 0 : index
      %59 = vector.load %arg5[%c0_22, %c0_23] : memref<8x128xf32, #tpu.memory_space<vmem>>, vector<8x128xf32>
      tpu.vector_store %arg5[%c0_22, %c0_23], %58 {strides = array<i32>} : memref<8x128xf32, #tpu.memory_space<vmem>>, vector<8x128xf32>,
    } else {
    }
    %c0_i32_15 = arith.constant 0 : i32
    %41 = arith.cmpi eq, %arg1, %c0_i32_15 : i32
    %42 = arith.extui %41 : i1 to i32
    %c0_i32_16 = arith.constant 0 : i32
    %43 = arith.cmpi ne, %42, %c0_i32_16 : i32
    scf.if %43 {
      %c0_17 = arith.constant 0 : index
      %c0_18 = arith.constant 0 : index
      %44 = vector.load %arg5[%c0_17, %c0_18] : memref<8x128xf32, #tpu.memory_space<vmem>>, vector<8x128xf32>
      %c0_19 = arith.constant 0 : index
      %c0_20 = arith.constant 0 : index
      %c0_21 = arith.constant 0 : index
      %45 = vector.load %arg4[%c0_19, %c0_20, %c0_21] : memref<1x8x128xf32, #tpu.memory_space<vmem>>, vector<1x8x128xf32>
      %46 = vector.shape_cast %45 : vector<1x8x128xf32> to vector<8x128xf32>
      %47 = vector.shape_cast %44 : vector<8x128xf32> to vector<1x8x128xf32>
      tpu.vector_store %arg4[%c0_19, %c0_20, %c0_21], %47 {strides = array<i32>} : memref<1x8x128xf32, #tpu.memory_space<vmem>>, vector<1x8x128xf32>,
    } else {
    }
    return
  }
  func.func @transform_0(%arg0: i32, %arg1: i32) -> (i32, i32) {
    %c1_i32 = arith.constant 1 : i32
    %0 = arith.muli %arg0, %c1_i32 : i32
    %1 = arith.addi %0, %arg1 : i32
    %c0_i32 = arith.constant 0 : i32
    %c0_i32_0 = arith.constant 0 : i32
    return %1, %c0_i32 : i32, i32
  }
  func.func @transform_1(%arg0: i32, %arg1: i32) -> (i32, i32) {
    %c1_i32 = arith.constant 1 : i32
    %0 = arith.muli %arg0, %c1_i32 : i32
    %1 = arith.addi %0, %arg1 : i32
    %c0_i32 = arith.constant 0 : i32
    %c0_i32_0 = arith.constant 0 : i32
    return %1, %c0_i32 : i32, i32
  }
  func.func @transform_2(%arg0: i32, %arg1: i32) -> (i32, i32, i32) {
    %c0_i32 = arith.constant 0 : i32
    %c0_i32_0 = arith.constant 0 : i32
    %c0_i32_1 = arith.constant 0 : i32
    return %arg0, %c0_i32, %c0_i32_0 : i32, i32, i32
  }
}

</mosaic_0001>

<llo_original>
// kernel: tpu_custom_call.1
$region0: #{tpu_custom_call.1}
  #allocation0 [shape = 'u32[]', space=smem, size = 0x4, offset = 0x4, fixed_abs, tag = 'smem constant byte address 0x4 - core index']
  #allocation1 [shape = 'u32[72,128]{1,0:T(1,128)}', space=vmem, size = 0x9000, scoped, tag = 'internal scratch']
  #allocation2 [shape = 'f32[8,128]{1,0:T(8,128)}', space=vmem, size = 0x1000, scoped, tag = 'scratch operand']
  %s0 = inlined_call_operand.hbm [shape: f32[64,128], index: 0, kind: input, shape index: {}]
  %s1 = inlined_call_operand.hbm [shape: s8[64,128], index: 1, kind: input, shape index: {}]
  %s2 = inlined_call_operand.hbm [shape: f32[2,8,128], index: 2, kind: output, shape index: {}]
  %s3 = sld [smem:[#allocation0]]
  $region65: #{tpu_custom_call.1} parent=0
    _
  %s5 = ssub.s32 1, %s3
  %s6 = scalar_select 0, %s5, %s3
  $region1: #{tpu_custom_call.1} parent=0
    #allocation3 [shape = 'u8[32768]{0}', space=vmem, size = 0x8000, scoped, tag = 'input window, operand 0']
    #allocation4 [shape = 's32[2]{0}', space=sflag, size = 0x8, scoped, tag = 'scoped memory for tpu_custom_call.1']
    #allocation5 [shape = 's32[2]{0}', space=sflag, size = 0x8, scoped, tag = 'scoped memory for tpu_custom_call.1']
    #allocation6 [shape = 'u8[8192]{0}', space=vmem, size = 0x2000, scoped, tag = 'input window, operand 1']
    #allocation7 [shape = 's32[2]{0}', space=sflag, size = 0x8, scoped, tag = 'scoped memory for tpu_custom_call.1']
    #allocation8 [shape = 'u8[8192]{0}', space=vmem, size = 0x2000, scoped, tag = 'output window, operand 0']
    %7 = vsyncpa [#allocation4], 0
    %s8 = scalar_lea.sflag [#allocation4], 1
    %9 = vsyncpa %s8, 0
    %10 = vsyncpa [#allocation7], 0
    %s11 = scalar_lea.sflag [#allocation7], 1
    %12 = vsyncpa %s11, 0
    %13 = vsyncpa [#allocation5], 0
    %s14 = scalar_lea.sflag [#allocation5], 1
    %15 = vsyncpa %s14, 0
    loop: start=0, step=1, limit=4
    $region2: #{tpu_custom_call.1} parent=1 // loop_pre_header
      _
    $region3: #{tpu_custom_call.1} parent=1 // loop_header
      %s17 = sphi 0, %s21
      %p18 = scmp.ge.s32.totalorder %s17, 4
      %s24 = sphi 0, %s36
      %s25 = sphi 0, %s32
      %s26 = sphi 0, %s24
      %s27 = sphi 0, %s25
      %s28 = sphi 0, %s26
      %s29 = sphi 0, %s27
      %s41 = sphi 0, %s43
      %s44 = sphi 0, %s41
      %s45 = sphi 0, %s44
      %s61 = sphi 0, %s45
      %s69 = sphi 0, %s71
      %s72 = sphi 0, %s69
      %s73 = sphi 0, %s72
      %s89 = sphi 0, %s73
      %s95 = sphi 0, %s97
      %s98 = sphi 0, %s95
      %s99 = sphi 0, %s98
      %s115 = sphi 0, %s99
    $region4: #{tpu_custom_call.1} parent=1 // loop_header_branch
      %20 = sbr.rel (%p18) target = $region8
    $region5: #{tpu_custom_call.1} parent=1 // loop_body
      %s22 = ssub.s32 %s17, 1
      %s23 = ssub.s32 %s17, 2
      %s30 = sadd.s32 1, %s25
      %p31 = scmp.ge.s32.totalorder %s30, 1
      %s32 = scalar_select %p31, 0, %s30
      %s33 = sadd.s32 1, %s24
      %s34 = scalar_select %p31, %s33, %s24
      %p35 = scmp.ge.s32.totalorder %s34, 2
      %s36 = scalar_select %p35, 0, %s34
      %s37 = sadd.s32 %s24, %s25
      %s38 = sadd.s32 %s36, %s32
      %s39 = ssub.s32 %s37, %s38
      %p40 = scmp.eq.s32.totalorder %s39, 0
      %s42 = sadd.s32 %s41, 1
      %s43 = scalar_select %p40, %s41, %s42
      %p46 = pneg %p40
      %p47 = scmp.eq.s32.totalorder %s17, 1
      %p48 = por %p46, %p47
      %p49 = scmp.ne.s32.totalorder %s41, %s44
      %p50 = scmp.eq.s32.totalorder %s17, 0
      %p51 = por %p49, %p50
      %p52 = scmp.ne.s32.totalorder %s41, %s44
      %p53 = scmp.eq.s32.totalorder %s22, 1
      %p54 = por %p52, %p53
      %p55 = scmp.ne.s32.totalorder %s44, %s45
      %p56 = scmp.eq.s32.totalorder %s22, 0
      %p57 = por %p55, %p56
      %p58 = scmp.ne.s32.totalorder %s44, %s45
      %p59 = scmp.eq.s32.totalorder %s23, 1
      %p60 = por %p58, %p59
      %p62 = scmp.ne.s32.totalorder %s45, %s61
      %p63 = scmp.eq.s32.totalorder %s23, 0
      %p64 = por %p62, %p63
      %s65 = sadd.s32 %s24, %s25
      %s66 = sadd.s32 %s36, %s32
      %s67 = ssub.s32 %s65, %s66
      %p68 = scmp.eq.s32.totalorder %s67, 0
      %s70 = sadd.s32 %s69, 1
      %s71 = scalar_select %p68, %s69, %s70
      %p74 = pneg %p68
      %p75 = scmp.eq.s32.totalorder %s17, 1
      %p76 = por %p74, %p75
      %p77 = scmp.ne.s32.totalorder %s69, %s72
      %p78 = scmp.eq.s32.totalorder %s17, 0
      %p79 = por %p77, %p78
      %p80 = scmp.ne.s32.totalorder %s69, %s72
      %p81 = scmp.eq.s32.totalorder %s22, 1
      %p82 = por %p80, %p81
      %p83 = scmp.ne.s32.totalorder %s72, %s73
      %p84 = scmp.eq.s32.totalorder %s22, 0
      %p85 = por %p83, %p84
      %p86 = scmp.ne.s32.totalorder %s72, %s73
      %p87 = scmp.eq.s32.totalorder %s23, 1
      %p88 = por %p86, %p87
      %p90 = scmp.ne.s32.totalorder %s73, %s89
      %p91 = scmp.eq.s32.totalorder %s23, 0
      %p92 = por %p90, %p91
      %s93 = ssub.s32 %s24, %s36
      %p94 = scmp.eq.s32.totalorder %s93, 0
      %s96 = sadd.s32 %s95, 1
      %s97 = scalar_select %p94, %s95, %s96
      %p100 = pneg %p94
      %p101 = scmp.eq.s32.totalorder %s17, 1
      %p102 = por %p100, %p101
      %p103 = scmp.ne.s32.totalorder %s95, %s98
      %p104 = scmp.eq.s32.totalorder %s17, 0
      %p105 = por %p103, %p104
      %p106 = scmp.ne.s32.totalorder %s95, %s98
      %p107 = scmp.eq.s32.totalorder %s22, 1
      %p108 = por %p106, %p107
      %p109 = scmp.ne.s32.totalorder %s98, %s99
      %p110 = scmp.eq.s32.totalorder %s22, 0
      %p111 = por %p109, %p110
      %p112 = scmp.ne.s32.totalorder %s98, %s99
      %p113 = scmp.eq.s32.totalorder %s23, 1
      %p114 = por %p112, %p113
      %p116 = scmp.ne.s32.totalorder %s99, %s115
      %p117 = scmp.eq.s32.totalorder %s23, 0
      %p118 = por %p116, %p117
      %p119 = scmp.le.s32.totalorder 1, %s17
      %p120 = scmp.lt.s32.totalorder %s17, 3
      %p121 = pnand %p119, %p120
      %p122 = pneg %p121
      // Predicated region
      $region9: #{tpu_custom_call.1} parent=5 // pred_check
        _
      $region10: #{tpu_custom_call.1} parent=5 // pred_check_branch
        %124 = sbr.rel (%p121) target = $region12
      $region11: #{tpu_custom_call.1} parent=5 // pred_region
        %s125 = ssub.s32 %s17, 1
      $region12: #{tpu_custom_call.1} parent=5 // pred_fallthru
        _
      %p126 = scmp.lt.s32.totalorder %s17, 2
      // Predicated region
      $region13: #{tpu_custom_call.1} parent=5 // pred_check
        %p127 = pneg %p126
      $region14: #{tpu_custom_call.1} parent=5 // pred_check_branch
        %129 = sbr.rel (%p127) target = $region16
      $region15: #{tpu_custom_call.1} parent=5 // pred_region
        // Predicated region
        $region17: #{tpu_custom_call.1} parent=15 // pred_check
          %p130 = pneg %p51
        $region18: #{tpu_custom_call.1} parent=15 // pred_check_branch
          %132 = sbr.rel (%p130) target = $region20
        $region19: #{tpu_custom_call.1} parent=15 // pred_region
          %s133 = sand.u32 %s41, 1
          %s134 = scalar_lea.sflag [#allocation4], %s133
          %s135 = sand.u32 %s41, 1
          %s136 = smul.addr %s135, 32
          %s137 = scalar_lea.vmem [#allocation3], %s136
          %s138 = sadd.s32 %s24, %s25
          %s139 = smul.u32 4, %s138
          %141 = vsyncadd %s134, 0
          %s142 = smul.addr %s139, 8
          %s143 = scalar_lea.hbm %s0, %s142
          %s144 = sshll.u32 %s143, 4
          %s145 = int_to_ptr.hbm [resolvable:$true] %s144
          %s146 = sshll.u32 %s137, 4
          %s147 = int_to_ptr.vmem [resolvable:$true] %s146
          %152 = dma.hbm_to_vmem [thread:$0]  %s145, 512, %s147, %s134, 128, 128, 8
        $region20: #{tpu_custom_call.1} parent=15 // pred_fallthru
          _
        // Predicated region
        $region21: #{tpu_custom_call.1} parent=15 // pred_check
          %p153 = pneg %p79
        $region22: #{tpu_custom_call.1} parent=15 // pred_check_branch
          %155 = sbr.rel (%p153) target = $region24
        $region23: #{tpu_custom_call.1} parent=15 // pred_region
          %s156 = sand.u32 %s69, 1
          %s157 = scalar_lea.sflag [#allocation7], %s156
          %s158 = sand.u32 %s69, 1
          %s159 = smul.addr %s158, 8
          %s160 = scalar_lea.vmem [#allocation6], %s159
          %s161 = sadd.s32 %s24, %s25
          %163 = vsyncadd %s157, 0
          %s164 = smul.addr %s161, 8
          %s165 = scalar_lea.hbm %s1, %s164
          %s167 = sshll.u32 %s165, 4
          %s168 = int_to_ptr.hbm [resolvable:$true] %s167
          %s169 = sshll.u32 %s160, 4
          %s170 = int_to_ptr.vmem [resolvable:$true] %s169
          %172 = dma.hbm_to_vmem [thread:$0]  %s168, 128, %s170, %s157
        $region24: #{tpu_custom_call.1} parent=15 // pred_fallthru
          _
      $region16: #{tpu_custom_call.1} parent=5 // pred_fallthru
        _
      %p173 = scmp.le.s32.totalorder 1, %s17
      %p174 = scmp.lt.s32.totalorder %s17, 3
      %p175 = pnand %p173, %p174
      %p176 = pneg %p175
      // Predicated region
      $region25: #{tpu_custom_call.1} parent=5 // pred_check
        _
      $region26: #{tpu_custom_call.1} parent=5 // pred_check_branch
        %178 = sbr.rel (%p175) target = $region28
      $region27: #{tpu_custom_call.1} parent=5 // pred_region
        %s179 = ssub.s32 %s17, 1
        %s180 = sand.u32 %s44, 1
        %s181 = scalar_lea.sflag [#allocation4], %s180
        %s182 = sand.u32 %s44, 1
        %s183 = smul.addr %s182, 32
        %s184 = scalar_lea.vmem [#allocation3], %s183
        // Predicated region
        $region29: #{tpu_custom_call.1} parent=27 // pred_check
          %p185 = pneg %p57
        $region30: #{tpu_custom_call.1} parent=27 // pred_check_branch
          %187 = sbr.rel (%p185) target = $region32
        $region31: #{tpu_custom_call.1} parent=27 // pred_region
          %189 = dma.done %s181, 512
        $region32: #{tpu_custom_call.1} parent=27 // pred_fallthru
          _
        %s190 = sand.u32 %s72, 1
        %s191 = scalar_lea.sflag [#allocation7], %s190
        %s192 = sand.u32 %s72, 1
        %s193 = smul.addr %s192, 8
        %s194 = scalar_lea.vmem [#allocation6], %s193
        // Predicated region
        $region33: #{tpu_custom_call.1} parent=27 // pred_check
          %p195 = pneg %p85
        $region34: #{tpu_custom_call.1} parent=27 // pred_check_branch
          %197 = sbr.rel (%p195) target = $region36
        $region35: #{tpu_custom_call.1} parent=27 // pred_region
          %199 = dma.done %s191, 128
        $region36: #{tpu_custom_call.1} parent=27 // pred_fallthru
          _
        %s200 = sand.u32 %s44, 1
        %s201 = scalar_lea.sflag [#allocation4], %s200
        %s202 = sand.u32 %s44, 1
        %s203 = smul.addr %s202, 32
        %s204 = scalar_lea.vmem [#allocation3], %s203
        %p205 = pneg %p57
        %p206 = pneg %p54
        %s207 = sand.u32 %s72, 1
        %s208 = scalar_lea.sflag [#allocation7], %s207
        %s209 = sand.u32 %s72, 1
        %s210 = smul.addr %s209, 8
        %s211 = scalar_lea.vmem [#allocation6], %s210
        %p212 = pneg %p85
        %p213 = pneg %p82
        %p214 = pneg %p111
        %p215 = pneg %p108
        %s216 = sand.u32 %s98, 1
        %s217 = scalar_lea.sflag [#allocation5], %s216
        %s218 = sand.u32 %s98, 1
        %s219 = smul.addr %s218, 8
        %s220 = scalar_lea.vmem [#allocation8], %s219
        %s221 = sadd.s32 %s26, %s27
        %s222 = smul.u32 4, %s221
        %s223 = sadd.s32 %s26, %s27
        %p224 = scmp.eq.s32.totalorder %s27, 0
        // Predicated region
        $region37: #{tpu_custom_call.1} parent=27 // pred_check
          %p225 = pneg %p224
        $region38: #{tpu_custom_call.1} parent=27 // pred_check_branch
          %227 = sbr.rel (%p225) target = $region40
        $region39: #{tpu_custom_call.1} parent=27 // pred_region
          %228 = vst [vmem:[#allocation2] sm:$0xff] 0.0
        $region40: #{tpu_custom_call.1} parent=27 // pred_fallthru
          _
        %v229 = vld [vmem:[%s184] sm:$0xff]
        %v230 = vld [vmem:[%s184 + $0x8] sm:$0xff]
        %v231 = vld [vmem:[%s184 + $0x10] sm:$0xff]
        %v232 = vld [vmem:[%s184 + $0x18] sm:$0xff]
        %v233 = vld [vmem:[%s194] sm:$0xff]
        %v234 = vunpack.c.0.s8 %v233
        %v235 = vunpack.c.1.s8 %v233
        %v236 = vunpack.c.2.s8 %v233
        %v237 = vunpack.c.3.s8 %v233
        %v238 = vcvt.s32.f32 %v234
        %v239 = vcvt.s32.f32 %v235
        %v240 = vcvt.s32.f32 %v236
        %v241 = vcvt.s32.f32 %v237
        %vm242 = vcmp.eq.f32.partialorder %v238, 1.0
        %vm243 = vcmp.eq.f32.partialorder %v239, 1.0
        %vm244 = vcmp.eq.f32.partialorder %v240, 1.0
        %vm245 = vcmp.eq.f32.partialorder %v241, 1.0
        %v246 = vxor.u32 %v229, 2147483648
        %v247 = vxor.u32 %v230, 2147483648
        %v248 = vxor.u32 %v231, 2147483648
        %v249 = vxor.u32 %v232, 2147483648
        %v250 = vmul.f32 %v246, 1.442695
        %v251 = vpow.pop %v250
        %v252 = vmul.f32 %v247, 1.442695
        %v253 = vpow.pop %v252
        %v254 = vmul.f32 %v248, 1.442695
        %v255 = vpow.pop %v254
        %v256 = vmul.f32 %v249, 1.442695
        %v257 = vpow.pop %v256
        %v258 = vadd.f32 %v251, 1.0
        %v259 = vadd.f32 %v253, 1.0
        %v260 = vadd.f32 %v255, 1.0
        %v261 = vadd.f32 %v257, 1.0
        %v262 = vrcp.pop %v258
        %v263 = vmul.f32 %v258, %v262
        %v264 = vsub.f32 1.0, %v263
        %v265 = vmul.f32 %v262, %v264
        %v266 = vadd.f32 %v262, %v265
        %vm267 = vweird.f32 %v258
        %vm268 = vweird.f32 %v262
        %vm269 = vmor %vm267, %vm268
        %v270 = vsel %vm269, %v262, %v266
        %v271 = vand.u32 2147483647, %v258
        %vm272 = vcmp.eq.f32.partialorder %v271, 8.507059e+37
        %v273 = vand.u32 %v258, 2147483648
        %v274 = vor.u32 1.1754944e-38, %v273
        %v275 = vsel %vm272, %v274, %v270
        %v276 = vmul.f32 1.0, %v275
        %v277 = vrcp.pop %v259
        %v278 = vmul.f32 %v259, %v277
        %v279 = vsub.f32 1.0, %v278
        %v280 = vmul.f32 %v277, %v279
        %v281 = vadd.f32 %v277, %v280
        %vm282 = vweird.f32 %v259
        %vm283 = vweird.f32 %v277
        %vm284 = vmor %vm282, %vm283
        %v285 = vsel %vm284, %v277, %v281
        %v286 = vand.u32 2147483647, %v259
        %vm287 = vcmp.eq.f32.partialorder %v286, 8.507059e+37
        %v288 = vand.u32 %v259, 2147483648
        %v289 = vor.u32 1.1754944e-38, %v288
        %v290 = vsel %vm287, %v289, %v285
        %v291 = vmul.f32 1.0, %v290
        %v292 = vrcp.pop %v260
        %v293 = vmul.f32 %v260, %v292
        %v294 = vsub.f32 1.0, %v293
        %v295 = vmul.f32 %v292, %v294
        %v296 = vadd.f32 %v292, %v295
        %vm297 = vweird.f32 %v260
        %vm298 = vweird.f32 %v292
        %vm299 = vmor %vm297, %vm298
        %v300 = vsel %vm299, %v292, %v296
        %v301 = vand.u32 2147483647, %v260
        %vm302 = vcmp.eq.f32.partialorder %v301, 8.507059e+37
        %v303 = vand.u32 %v260, 2147483648
        %v304 = vor.u32 1.1754944e-38, %v303
        %v305 = vsel %vm302, %v304, %v300
        %v306 = vmul.f32 1.0, %v305
        %v307 = vrcp.pop %v261
        %v308 = vmul.f32 %v261, %v307
        %v309 = vsub.f32 1.0, %v308
        %v310 = vmul.f32 %v307, %v309
        %v311 = vadd.f32 %v307, %v310
        %vm312 = vweird.f32 %v261
        %vm313 = vweird.f32 %v307
        %vm314 = vmor %vm312, %vm313
        %v315 = vsel %vm314, %v307, %v311
        %v316 = vand.u32 2147483647, %v261
        %vm317 = vcmp.eq.f32.partialorder %v316, 8.507059e+37
        %v318 = vand.u32 %v261, 2147483648
        %v319 = vor.u32 1.1754944e-38, %v318
        %v320 = vsel %vm317, %v319, %v315
        %v321 = vmul.f32 1.0, %v320
        %v322 = vsub.f32 1.0, %v276
        %v323 = vsub.f32 1.0, %v291
        %v324 = vsub.f32 1.0, %v306
        %v325 = vsub.f32 1.0, %v321
        %v326 = vsel %vm242, %v276, %v322
        %v327 = vsel %vm243, %v291, %v323
        %v328 = vsel %vm244, %v306, %v324
        %v329 = vsel %vm245, %v321, %v325
        %v330 = vmax.f32 %v326, 0.0001
        %v331 = vmax.f32 %v327, 0.0001
        %v332 = vmax.f32 %v328, 0.0001
        %v333 = vmax.f32 %v329, 0.0001
        %v334 = vmin.f32 %v330, 1.0
        %v335 = vmin.f32 %v331, 1.0
        %v336 = vmin.f32 %v332, 1.0
        %v337 = vmin.f32 %v333, 1.0
        %v338 = vlog2.pop %v334
        %v339 = vmul.f32 %v338, 0.6931472
        %v340 = vlog2.pop %v335
        %v341 = vmul.f32 %v340, 0.6931472
        %v342 = vlog2.pop %v336
        %v343 = vmul.f32 %v342, 0.6931472
        %v344 = vlog2.pop %v337
        %v345 = vmul.f32 %v344, 0.6931472
        %v346 = vsel %vm242, 0.25, 0.75
        %v347 = vsel %vm243, 0.25, 0.75
        %v348 = vsel %vm244, 0.25, 0.75
        %v349 = vsel %vm245, 0.25, 0.75
        %v350 = vsub.f32 1.0, %v334
        %v351 = vsub.f32 1.0, %v335
        %v352 = vsub.f32 1.0, %v336
        %v353 = vsub.f32 1.0, %v337
        %v354 = vmul.f32 %v350, %v350
        %v355 = vmul.f32 %v351, %v351
        %v356 = vmul.f32 %v352, %v352
        %v357 = vmul.f32 %v353, %v353
        %v358 = vsub.f32 0.0, %v346
        %v359 = vsub.f32 0.0, %v347
        %v360 = vsub.f32 0.0, %v348
        %v361 = vsub.f32 0.0, %v349
        %v362 = vmul.f32 %v358, %v354
        %v363 = vmul.f32 %v359, %v355
        %v364 = vmul.f32 %v360, %v356
        %v365 = vmul.f32 %v361, %v357
        %v366 = vmul.f32 %v362, %v339
        %v367 = vmul.f32 %v363, %v341
        %v368 = vmul.f32 %v364, %v343
        %v369 = vmul.f32 %v365, %v345
        %s370 = sadd.s32 %s26, %s27
        %s371 = smul.u32 %s370, 4096
        %s372 = sadd.s32 %s371, 4096
        %p373 = scmp.le.s32.totalorder %s372, 2048
        // Predicated region
        $region41: #{tpu_custom_call.1} parent=27 // pred_check
          %p374 = pneg %p373
        $region42: #{tpu_custom_call.1} parent=27 // pred_check_branch
          %376 = sbr.rel (%p374) target = $region44
        $region43: #{tpu_custom_call.1} parent=27 // pred_region
          %v377 = vld [vmem:[#allocation2] sm:$0xff]
          %v378 = vadd.f32 %v366, %v367
          %v379 = vadd.f32 %v378, %v368
          %v380 = vadd.f32 %v379, %v369
          %v381 = vadd.f32 %v377, %v380
          %382 = vst [vmem:[#allocation2] sm:$0xff] %v381
        $region44: #{tpu_custom_call.1} parent=27 // pred_fallthru
          _
        %p383 = scmp.gt.s32.totalorder %s372, 2048
        // Predicated region
        $region45: #{tpu_custom_call.1} parent=27 // pred_check
          %p384 = pneg %p383
        $region46: #{tpu_custom_call.1} parent=27 // pred_check_branch
          %386 = sbr.rel (%p384) target = $region48
        $region47: #{tpu_custom_call.1} parent=27 // pred_region
          %v387 = vlaneseq
          %v388 = vshrl.u32 %v387, 7
          %v389 = vadd.s32 %v388, 8
          %v390 = vadd.s32 %v388, 16
          %v391 = vadd.s32 %v388, 24
          %v392 = vlaneseq
          %v393 = vand.u32 %v392, 127
          %v394 = vmul.u32 %v388, 128
          %v395 = vmul.u32 %v389, 128
          %v396 = vmul.u32 %v390, 128
          %v397 = vmul.u32 %v391, 128
          %v398 = vstv %s371
          %v399 = vadd.s32 %v398, %v394
          %v400 = vadd.s32 %v398, %v395
          %v401 = vadd.s32 %v398, %v396
          %v402 = vadd.s32 %v398, %v397
          %v403 = vadd.s32 %v399, %v393
          %v404 = vadd.s32 %v400, %v393
          %v405 = vadd.s32 %v401, %v393
          %v406 = vadd.s32 %v402, %v393
          %vm407 = vcmp.lt.s32.totalorder %v403, 2048
          %vm408 = vcmp.lt.s32.totalorder %v404, 2048
          %vm409 = vcmp.lt.s32.totalorder %v405, 2048
          %vm410 = vcmp.lt.s32.totalorder %v406, 2048
          %v411 = vsel %vm407, %v366, 0.0
          %v412 = vsel %vm408, %v367, 0.0
          %v413 = vsel %vm409, %v368, 0.0
          %v414 = vsel %vm410, %v369, 0.0
          %v415 = vld [vmem:[#allocation2] sm:$0xff]
          %v416 = vadd.f32 %v411, %v412
          %v417 = vadd.f32 %v416, %v413
          %v418 = vadd.f32 %v417, %v414
          %v419 = vadd.f32 %v415, %v418
          %420 = vst [vmem:[#allocation2] sm:$0xff] %v419
        $region48: #{tpu_custom_call.1} parent=27 // pred_fallthru
          _
        // Predicated region
        $region49: #{tpu_custom_call.1} parent=27 // pred_check
          %p421 = pneg %p224
        $region50: #{tpu_custom_call.1} parent=27 // pred_check_branch
          %423 = sbr.rel (%p421) target = $region52
        $region51: #{tpu_custom_call.1} parent=27 // pred_region
          %v424 = vld [vmem:[#allocation2] sm:$0xff]
          %425 = vst [vmem:[%s220] sm:$0xff] %v424
        $region52: #{tpu_custom_call.1} parent=27 // pred_fallthru
          _
        %s426 = sand.u32 %s98, 1
        %s427 = scalar_lea.sflag [#allocation5], %s426
        %s428 = sand.u32 %s98, 1
        %s429 = smul.addr %s428, 8
        %s430 = scalar_lea.vmem [#allocation8], %s429
        // Predicated region
        $region53: #{tpu_custom_call.1} parent=27 // pred_check
          %p431 = pneg %p108
        $region54: #{tpu_custom_call.1} parent=27 // pred_check_branch
          %433 = sbr.rel (%p431) target = $region56
        $region55: #{tpu_custom_call.1} parent=27 // pred_region
          %435 = vsyncadd %s427, 0
          %s436 = smul.addr %s26, 8
          %s437 = scalar_lea.hbm %s2, %s436
          %s439 = sshll.u32 %s430, 4
          %s440 = int_to_ptr.vmem [resolvable:$true] %s439
          %s441 = sshll.u32 %s437, 4
          %s442 = int_to_ptr.hbm [resolvable:$true] %s441
          %444 = dma.vmem_to_hbm [thread:$0]  %s440, 128, %s442, %s427
        $region56: #{tpu_custom_call.1} parent=27 // pred_fallthru
          _
      $region28: #{tpu_custom_call.1} parent=5 // pred_fallthru
        _
      %p445 = scmp.le.s32.totalorder 2, %s17
      // Predicated region
      $region57: #{tpu_custom_call.1} parent=5 // pred_check
        %p446 = pneg %p445
      $region58: #{tpu_custom_call.1} parent=5 // pred_check_branch
        %448 = sbr.rel (%p446) target = $region60
      $region59: #{tpu_custom_call.1} parent=5 // pred_region
        %s449 = ssub.s32 %s17, 2
        // Predicated region
        $region61: #{tpu_custom_call.1} parent=59 // pred_check
          %p450 = pneg %p114
        $region62: #{tpu_custom_call.1} parent=59 // pred_check_branch
          %452 = sbr.rel (%p450) target = $region64
        $region63: #{tpu_custom_call.1} parent=59 // pred_region
          %s453 = sand.u32 %s99, 1
          %s454 = scalar_lea.sflag [#allocation5], %s453
          %s455 = sand.u32 %s99, 1
          %s456 = smul.addr %s455, 8
          %s457 = scalar_lea.vmem [#allocation8], %s456
          %459 = dma.done %s454, 128
        $region64: #{tpu_custom_call.1} parent=59 // pred_fallthru
          _
      $region60: #{tpu_custom_call.1} parent=5 // pred_fallthru
        _
    $region6: #{tpu_custom_call.1} parent=1 // loop_footer
      %s21 = sadd.s32 1, %s17
    $region7: #{tpu_custom_call.1} parent=1 // loop_footer_branch
      %16 = sbr.rel target = $region3
    $region8: #{tpu_custom_call.1} parent=1 // loop_exit
      _
    %460 = vsyncpa [#allocation4], 1
    %s461 = scalar_lea.sflag [#allocation4], 1
    %462 = vsyncpa %s461, 1
    %463 = vsyncpa [#allocation7], 1
    %s464 = scalar_lea.sflag [#allocation7], 1
    %465 = vsyncpa %s464, 1
    %466 = vsyncpa [#allocation5], 1
    %s467 = scalar_lea.sflag [#allocation5], 1
    %468 = vsyncpa %s467, 1

</llo_original>
